<compile_context>
chip_gen: v5e
topology: v5e:2x2
jax: 0.10.0
libtpu: 0.0.40
codegen_flags: <defaults>
</compile_context>

<pallas_src>
import functools

import jax
import jax.numpy as jnp
from jax import lax
from jax.experimental import pallas as pl
from jax.experimental.pallas import tpu as pltpu


def _round_up(x, m):
    return ((x + m - 1) // m) * m


# ----------------------------------------------------------------------------
# Kernel A (small 2C): whole 3x3 conv as ONE im2col matmul + ReLU + fused head
# ----------------------------------------------------------------------------
def _rpn_head_kernel_im2col(x_ref, w1_ref, b1_ref, wh_ref, bh_ref, out_ref,
                            *, th, wq):
    """x_ref : (1, th, wq, 9*2C) bf16   im2col'd tile (exact, non-overlapping)
       w1_ref: (9*2C, 2C)        bf16
       b1_ref: (1, 2C)           f32
       wh_ref: (2C, NOUT_PAD)    bf16   fused [cls | reg | zero-pad] 1x1 head
       bh_ref: (1, NOUT_PAD)     f32
       out_ref:(1, th, wq, NOUT_PAD) bf16  lane-dense output slab
    """
    m = th * wq
    patch = x_ref[0].reshape(m, x_ref.shape[-1])               # wq % 8 == 0
    acc = jnp.dot(patch, w1_ref[...], preferred_element_type=jnp.float32)
    t = jnp.maximum(acc + b1_ref[...], 0.0).astype(wh_ref.dtype)
    head = jnp.dot(t, wh_ref[...],
                   preferred_element_type=jnp.float32) + bh_ref[...]
    out_ref[0] = head.astype(out_ref.dtype).reshape(th, wq, -1)


# ----------------------------------------------------------------------------
# Kernel B (large 2C): 9 tap matmuls, chained accumulation, XLU rolls for dx
# ----------------------------------------------------------------------------
def _rpn_head_kernel_taps(x_ref, w1_ref, b1_ref, wh_ref, bh_ref, out_ref,
                          *, th, wp):
    """x_ref : (1, 1, th+2, wp, 2C) bf16   halo-padded row tile (wp % 8 == 0)
       w1_ref: (9, 2C, 2C)          bf16   tap-major 3x3 conv weight
       (biases / head / output as in the im2col kernel)
    """
    c2 = x_ref.shape[-1]
    m = th * wp
    acc0 = acc1 = acc2 = None
    for dy in range(3):
        # dy shift = leading-dim slice (cheap, not a tiled dim); wp % 8 == 0
        # keeps the reshape inside (8,128) tiles (no relayout copy).
        patch = x_ref[0, 0, dy:dy + th].reshape(m, c2)
        p0 = jnp.dot(patch, w1_ref[3 * dy + 0], preferred_element_type=jnp.float32)
        p1 = jnp.dot(patch, w1_ref[3 * dy + 1], preferred_element_type=jnp.float32)
        p2 = jnp.dot(patch, w1_ref[3 * dy + 2], preferred_element_type=jnp.float32)
        acc0 = p0 if acc0 is None else acc0 + p0
        acc1 = p1 if acc1 is None else acc1 + p1
        acc2 = p2 if acc2 is None else acc2 + p2
    # dx = +1 / +2 column shifts as XLU rolls of the flattened partials; the
    # wrapped tail lands only in the zero-pad columns that the wrapper strips.
    acc = (acc0
           + pltpu.roll(acc1, shift=m - 1, axis=0)
           + pltpu.roll(acc2, shift=m - 2, axis=0))
    t = jnp.maximum(acc + b1_ref[...], 0.0).astype(wh_ref.dtype)
    head = jnp.dot(t, wh_ref[...],
                   preferred_element_type=jnp.float32) + bh_ref[...]
    out_ref[0] = head.astype(out_ref.dtype).reshape(th, wp, -1)


# ----------------------------------------------------------------------------
# Wrapper: one feature level
# ----------------------------------------------------------------------------
def rpn_head_forward(features_left, features_right, params, *, row_tile=32):
    """Stereo RPN head on one feature level.

    features_left / features_right: (B, C, H, W) float32 (PyTorch NCHW).
    Returns (objectness (B, A, H, W), rpn_box_regression (B, 4A, H, W)).
    """
    B, C, H, W = features_left.shape
    C2 = 2 * C
    A = params["w_cls"].shape[1]
    NOUT = 5 * A                                  # fused cls(A) + reg(4A)
    NOUT_PAD = max(128, _round_up(NOUT, 128))     # lane-dense output width

    # Row tile: large tiles amortize per-step overhead / halo duplication.
    th = min(row_tile, _round_up(H, 8))
    th = max(8, (th // 8) * 8)
    if B * (_round_up(H, th) // th) < 2 and th > 8:
        # v7x has 2 TensorCores sharding the parallel grid axes: keep >= 2 steps.
        th = _round_up(max(8, _round_up(H, 8) // 2), 8)
    Hpad = _round_up(H, th)
    NT = Hpad // th

    # Channel concat (== torch.cat) + NCHW -> NHWC (one unavoidable layout copy
    # given PyTorch-layout inputs).
    x = jnp.concatenate([features_left, features_right], axis=1)     # (B,2C,H,W)
    x = jnp.transpose(x, (0, 2, 3, 1))                               # (B,H,W,2C)

    # Fused 1x1 head: [cls | reg] zero-padded to 128 output lanes.
    w_head = jnp.concatenate([params["w_cls"], params["w_reg"]], axis=1)
    w_head = jnp.pad(w_head, ((0, 0), (0, NOUT_PAD - NOUT))).astype(jnp.bfloat16)
    b_head = jnp.concatenate([params["b_cls"], params["b_reg"]])
    b_head = jnp.pad(b_head, (0, NOUT_PAD - NOUT)).reshape(1, NOUT_PAD)
    b_head = b_head.astype(jnp.float32)
    b1 = params["b1"].reshape(1, C2).astype(jnp.float32)

    use_im2col = C2 < 128
    if use_im2col:
        # --- small-2C path: single im2col matmul, exact non-overlapping tiles
        Wq = _round_up(W, 8)
        xp = jnp.pad(x, ((0, 0), (1, 1), (1, 1), (0, 0)))            # SAME halo
        cols = [xp[:, dy:dy + H, dx:dx + W, :]
                for dy in range(3) for dx in range(3)]
        xim = jnp.concatenate(cols, axis=-1)                         # (B,H,W,9*2C)
        xim = jnp.pad(xim, ((0, 0), (0, Hpad - H), (0, Wq - W), (0, 0)))
        xim = xim.astype(jnp.bfloat16)
        w1 = params["w1"].reshape(9 * C2, C2).astype(jnp.bfloat16)

        kern = functools.partial(_rpn_head_kernel_im2col, th=th, wq=Wq)
        in_specs = [
            pl.BlockSpec((1, th, Wq, 9 * C2), lambda b, t: (b, t, 0, 0)),
            pl.BlockSpec((9 * C2, C2), lambda b, t: (0, 0)),
            pl.BlockSpec((1, C2), lambda b, t: (0, 0)),
            pl.BlockSpec((C2, NOUT_PAD), lambda b, t: (0, 0)),
            pl.BlockSpec((1, NOUT_PAD), lambda b, t: (0, 0)),
        ]
        operands = (xim, w1, b1, w_head, b_head)
        wcols = Wq
        conv_flops = 2 * B * Hpad * Wq * (9 * C2) * C2
        in_block_bytes = th * Wq * 9 * C2 * 2
    else:
        # --- large-2C path: 9 tap matmuls + rolls, halo-padded row tiles
        Wp = _round_up(W + 2, 8)
        xp = jnp.pad(x.astype(jnp.bfloat16),
                     ((0, 0), (1, 1 + Hpad - H), (1, Wp - W - 1), (0, 0)))
        row_idx = (jnp.arange(NT) * th)[:, None] + jnp.arange(th + 2)[None, :]
        xt = xp[:, row_idx]                                          # (B,NT,th+2,Wp,2C)
        w1 = params["w1"].reshape(9, C2, C2).astype(jnp.bfloat16)

        kern = functools.partial(_rpn_head_kernel_taps, th=th, wp=Wp)
        in_specs = [
            pl.BlockSpec((1, 1, th + 2, Wp, C2), lambda b, t: (b, t, 0, 0, 0)),
            pl.BlockSpec((9, C2, C2), lambda b, t: (0, 0, 0)),
            pl.BlockSpec((1, C2), lambda b, t: (0, 0)),
            pl.BlockSpec((C2, NOUT_PAD), lambda b, t: (0, 0)),
            pl.BlockSpec((1, NOUT_PAD), lambda b, t: (0, 0)),
        ]
        operands = (xt, w1, b1, w_head, b_head)
        wcols = Wp
        conv_flops = 2 * B * Hpad * Wp * 9 * C2 * C2
        in_block_bytes = (th + 2) * Wp * C2 * 2

    head_flops = 2 * B * Hpad * wcols * C2 * NOUT_PAD
    out_block_bytes = th * wcols * NOUT_PAD * 2
    acc_bytes = th * wcols * C2 * 4
    weight_bytes = (w1.size * 2 + w_head.size * 2
                    + b1.size * 4 + b_head.size * 4)
    # Double-buffered in/out blocks + weights + compiler temporaries (f32
    # partials / rolls / head result), with 2x slack.  96 MiB cap is fine on
    # v5e/v6e (128 MiB VMEM); on v7x (64 MiB/TC) pick row_tile so this stays
    # under ~56 MiB.
    vmem_need = (2 * in_block_bytes + 2 * out_block_bytes + 2 * weight_bytes
                 + 4 * acc_bytes + 2 * th * wcols * NOUT_PAD * 4)
    vmem_limit = int(min(max(2 * vmem_need, 32 * (1 << 20)), 96 * (1 << 20)))

    cost = pl.CostEstimate(
        flops=int(conv_flops + head_flops),
        transcendentals=0,
        bytes_accessed=int(operands[0].size * 2 + weight_bytes
                           + B * Hpad * wcols * NOUT_PAD * 2))

    out = pl.pallas_call(
        kern,
        out_shape=jax.ShapeDtypeStruct((B, Hpad, wcols, NOUT_PAD), jnp.bfloat16),
        grid=(B, NT),
        in_specs=in_specs,
        out_specs=pl.BlockSpec((1, th, wcols, NOUT_PAD),
                               lambda b, t: (b, t, 0, 0)),
        compiler_params=pltpu.CompilerParams(
            dimension_semantics=("parallel", "parallel"),
            vmem_limit_bytes=vmem_limit),
        cost_estimate=cost,
    )(*operands)

    out = out[:, :H, :W, :NOUT].astype(jnp.float32)       # strip pad, back to f32
    objectness = jnp.transpose(out[..., :A], (0, 3, 1, 2))             # (B,A,H,W)
    rpn_box_regression = jnp.transpose(out[..., A:], (0, 3, 1, 2))     # (B,4A,H,W)
    return objectness, rpn_box_regression


def rpn_module_forward(features_left_list, features_right_list, params):
    """Equivalent of RPNModule.forward for the head compute path."""
    objectness, rpn_box_regression = [], []
    for fl, fr in zip(features_left_list, features_right_list):
        o, r = rpn_head_forward(fl, fr, params)
        objectness.append(o)
        rpn_box_regression.append(r)
    return tuple(objectness), tuple(rpn_box_regression)


# ----------------------------------------------------------------------------
# get_union_boxes (xyxy): plain jnp — elementwise min/max, XLA fuses it for free
# ----------------------------------------------------------------------------
def get_union_boxes(left_bbox, right_bbox):
    """left_bbox, right_bbox: (N, 4) xyxy -> (N, 4) union box."""
    lo = jnp.minimum(left_bbox[:, :2], right_bbox[:, :2])
    hi = jnp.maximum(left_bbox[:, 2:], right_bbox[:, 2:])
    return jnp.concatenate([lo, hi], axis=1)


# ----------------------------------------------------------------------------
# Pure-JAX f32 reference (verification only)
# ----------------------------------------------------------------------------
def rpn_head_reference(xl, xr, params):
    x = jnp.concatenate([xl, xr], axis=1)                       # (B, 2C, H, W)
    dn = ("NCHW", "HWIO", "NCHW")
    t = lax.conv_general_dilated(x, params["w1"], (1, 1), "SAME",
                                 dimension_numbers=dn)
    t = jnp.maximum(t + params["b1"].reshape(1, -1, 1, 1), 0.0)
    wc = params["w_cls"].reshape(1, 1, *params["w_cls"].shape)
    wr = params["w_reg"].reshape(1, 1, *params["w_reg"].shape)
    obj = lax.conv_general_dilated(t, wc, (1, 1), "SAME", dimension_numbers=dn)
    reg = lax.conv_general_dilated(t, wr, (1, 1), "SAME", dimension_numbers=dn)
    obj = obj + params["b_cls"].reshape(1, -1, 1, 1)
    reg = reg + params["b_reg"].reshape(1, -1, 1, 1)
    return obj, reg


# ----------------------------------------------------------------------------
# Deterministic parameter init (shapes from RPNHead(in_channels*2, A))
# ----------------------------------------------------------------------------
def init_params(key, in_channels, num_anchors):
    C2 = 2 * in_channels
    A = num_anchors
    ks = jax.random.split(key, 6)
    s = 0.05
    return {
        "w1":    s * jax.random.normal(ks[0], (3, 3, C2, C2), jnp.float32),  # HWIO
        "b1":    s * jax.random.normal(ks[1], (C2,), jnp.float32),
        "w_cls": s * jax.random.normal(ks[2], (C2, A), jnp.float32),
        "b_cls": s * jax.random.normal(ks[3], (A,), jnp.float32),
        "w_reg": s * jax.random.normal(ks[4], (C2, 4 * A), jnp.float32),
        "b_reg": s * jax.random.normal(ks[5], (4 * A,), jnp.float32),
    }


if __name__ == "__main__":
    key = jax.random.PRNGKey(0)
    (k_xl, k_xr, k_p, k_bl, k_br,
     k_xl2, k_xr2, k_p2) = jax.random.split(key, 8)

    A = 3                                  # anchors per location

    # --- level 1: small channels (2C = 8) -> im2col path (module test size)
    B, C, H, W = 2, 4, 16, 16
    features_left = (jax.random.normal(k_xl, (B, C, H, W), jnp.float32),)
    features_right = (jax.random.normal(k_xr, (B, C, H, W), jnp.float32),)
    params = init_params(k_p, C, A)

    objectness, rpn_box_regression = rpn_module_forward(
        features_left, features_right, params)
    objectness = jax.block_until_ready(objectness)
    rpn_box_regression = jax.block_until_ready(rpn_box_regression)

    obj_ref, reg_ref = rpn_head_reference(features_left[0], features_right[0],
                                          params)
    assert objectness[0].shape == (B, A, H, W)
    assert rpn_box_regression[0].shape == (B, 4 * A, H, W)
    assert jnp.allclose(objectness[0], obj_ref, rtol=2e-2, atol=2e-2)
    assert jnp.allclose(rpn_box_regression[0], reg_ref, rtol=2e-2, atol=2e-2)

    # --- level 2: 2C = 128 -> per-tap (roll) path; B=1, non-multiple-of-8 H/W
    B2, C_big, H2, W2 = 1, 64, 12, 10
    xl2 = jax.random.normal(k_xl2, (B2, C_big, H2, W2), jnp.float32)
    xr2 = jax.random.normal(k_xr2, (B2, C_big, H2, W2), jnp.float32)
    params2 = init_params(k_p2, C_big, A)
    obj2, reg2 = rpn_head_forward(xl2, xr2, params2)
    obj2 = jax.block_until_ready(obj2)
    reg2 = jax.block_until_ready(reg2)
    obj2_ref, reg2_ref = rpn_head_reference(xl2, xr2, params2)
    assert obj2.shape == (B2, A, H2, W2)
    assert reg2.shape == (B2, 4 * A, H2, W2)
    assert jnp.allclose(obj2, obj2_ref, rtol=2e-2, atol=2.5e-2)
    assert jnp.allclose(reg2, reg2_ref, rtol=2e-2, atol=2.5e-2)

    # --- get_union_boxes check
    N = 8
    lb = 10.0 * jax.random.uniform(k_bl, (N, 4), jnp.float32)
    rb = 10.0 * jax.random.uniform(k_br, (N, 4), jnp.float32)
    ub = jax.block_until_ready(get_union_boxes(lb, rb))
    ub_ref = jnp.stack([jnp.minimum(lb[:, 0], rb[:, 0]),
                        jnp.minimum(lb[:, 1], rb[:, 1]),
                        jnp.maximum(lb[:, 2], rb[:, 2]),
                        jnp.maximum(lb[:, 3], rb[:, 3])], axis=1)
    assert jnp.allclose(ub, ub_ref)

    print("KERNEL_OK")
</pallas_src>

<mosaic_0001>
module attributes {stable_mosaic.version = 11 : i64} {
  func.func @_rpn_head_kernel_im2col(%arg0: i32, %arg1: i32, %arg2: memref<1x16x16x72xbf16, #tpu.memory_space<vmem>>, %arg3: memref<72x8xbf16, #tpu.memory_space<vmem>>, %arg4: memref<1x8xf32, #tpu.memory_space<vmem>>, %arg5: memref<8x128xbf16, #tpu.memory_space<vmem>>, %arg6: memref<1x128xf32, #tpu.memory_space<vmem>>, %arg7: memref<1x16x16x128xbf16, #tpu.memory_space<vmem>>) attributes {dimension_semantics = [#tpu.dimension_semantics<parallel>, #tpu.dimension_semantics<parallel>], iteration_bounds = array<i64: 2, 1>, scalar_prefetch = 0 : i64, scratch_operands = 0 : i64, tpu.core_type = #tpu.core_type<tc>, window_params = [{transform_indices = @transform_0, window_bounds = array<i64: 1, 16, 16, 72>}, {pipeline_mode = #tpu.pipeline_mode<synchronous>, transform_indices = @transform_1, window_bounds = array<i64: 72, 8>}, {pipeline_mode = #tpu.pipeline_mode<synchronous>, transform_indices = @transform_2, window_bounds = array<i64: 1, 8>}, {pipeline_mode = #tpu.pipeline_mode<synchronous>, transform_indices = @transform_3, window_bounds = array<i64: 8, 128>}, {pipeline_mode = #tpu.pipeline_mode<synchronous>, transform_indices = @transform_4, window_bounds = array<i64: 1, 128>}, {transform_indices = @transform_5, window_bounds = array<i64: 1, 16, 16, 128>}]} {
    %c0 = arith.constant 0 : index
    %c0_0 = arith.constant 0 : index
    %c0_1 = arith.constant 0 : index
    %c0_2 = arith.constant 0 : index
    %0 = vector.load %arg2[%c0, %c0_0, %c0_1, %c0_2] : memref<1x16x16x72xbf16, #tpu.memory_space<vmem>>, vector<1x16x16x72xbf16>
    %1 = vector.shape_cast %0 : vector<1x16x16x72xbf16> to vector<16x16x72xbf16>
    %2 = vector.shape_cast %1 : vector<16x16x72xbf16> to vector<256x72xbf16>
    %c0_3 = arith.constant 0 : index
    %c0_4 = arith.constant 0 : index
    %3 = vector.load %arg3[%c0_3, %c0_4] : memref<72x8xbf16, #tpu.memory_space<vmem>>, vector<72x8xbf16>
    %cst = arith.constant dense<0.000000e+00> : vector<256x8xf32>
    %4 = tpu.matmul %2, %3, %cst {dimension_numbers = #tpu.dot_dimension_numbers<[1], [0], [0], [1], [0, 0, 1, 1], [], []>} : vector<256x72xbf16>, vector<72x8xbf16>, vector<256x8xf32> -> vector<256x8xf32>
    %c0_5 = arith.constant 0 : index
    %c0_6 = arith.constant 0 : index
    %5 = vector.load %arg4[%c0_5, %c0_6] : memref<1x8xf32, #tpu.memory_space<vmem>>, vector<1x8xf32>
    %6 = vector.broadcast %5 : vector<1x8xf32> to vector<256x8xf32>
    %7 = arith.addf %4, %6 : vector<256x8xf32>
    %cst_7 = arith.constant 0.000000e+00 : f32
    %8 = vector.broadcast %cst_7 : f32 to vector<256x8xf32>
    %9 = arith.maximumf %7, %8 : vector<256x8xf32>
    %10 = arith.truncf %9 : vector<256x8xf32> to vector<256x8xbf16>
    %c0_8 = arith.constant 0 : index
    %c0_9 = arith.constant 0 : index
    %11 = vector.load %arg5[%c0_8, %c0_9] : memref<8x128xbf16, #tpu.memory_space<vmem>>, vector<8x128xbf16>
    %cst_10 = arith.constant dense<0.000000e+00> : vector<256x128xf32>
    %12 = tpu.matmul %10, %11, %cst_10 {dimension_numbers = #tpu.dot_dimension_numbers<[1], [0], [0], [1], [0, 0, 1, 1], [], []>} : vector<256x8xbf16>, vector<8x128xbf16>, vector<256x128xf32> -> vector<256x128xf32>
    %c0_11 = arith.constant 0 : index
    %c0_12 = arith.constant 0 : index
    %13 = vector.load %arg6[%c0_11, %c0_12] : memref<1x128xf32, #tpu.memory_space<vmem>>, vector<1x128xf32>
    %14 = vector.broadcast %13 : vector<1x128xf32> to vector<256x128xf32>
    %15 = arith.addf %12, %14 : vector<256x128xf32>
    %16 = arith.truncf %15 : vector<256x128xf32> to vector<256x128xbf16>
    %17 = vector.shape_cast %16 : vector<256x128xbf16> to vector<16x16x128xbf16>
    %c0_13 = arith.constant 0 : index
    %c0_14 = arith.constant 0 : index
    %c0_15 = arith.constant 0 : index
    %c0_16 = arith.constant 0 : index
    %18 = vector.load %arg7[%c0_13, %c0_14, %c0_15, %c0_16] : memref<1x16x16x128xbf16, #tpu.memory_space<vmem>>, vector<1x16x16x128xbf16>
    %19 = vector.shape_cast %18 : vector<1x16x16x128xbf16> to vector<16x16x128xbf16>
    %20 = vector.shape_cast %17 : vector<16x16x128xbf16> to vector<1x16x16x128xbf16>
    tpu.vector_store %arg7[%c0_13, %c0_14, %c0_15, %c0_16], %20 {strides = array<i32>} : memref<1x16x16x128xbf16, #tpu.memory_space<vmem>>, vector<1x16x16x128xbf16>,
    return
  }
  func.func @transform_0(%arg0: i32, %arg1: i32) -> (i32, i32, i32, i32) {
    %c0_i32 = arith.constant 0 : i32
    %c0_i32_0 = arith.constant 0 : i32
    %c0_i32_1 = arith.constant 0 : i32
    return %arg0, %arg1, %c0_i32, %c0_i32_0 : i32, i32, i32, i32
  }
  func.func @transform_1(%arg0: i32, %arg1: i32) -> (i32, i32) {
    %c0_i32 = arith.constant 0 : i32
    %c0_i32_0 = arith.constant 0 : i32
    %c0_i32_1 = arith.constant 0 : i32
    return %c0_i32, %c0_i32_0 : i32, i32
  }
  func.func @transform_2(%arg0: i32, %arg1: i32) -> (i32, i32) {
    %c0_i32 = arith.constant 0 : i32
    %c0_i32_0 = arith.constant 0 : i32
    %c0_i32_1 = arith.constant 0 : i32
    return %c0_i32, %c0_i32_0 : i32, i32
  }
  func.func @transform_3(%arg0: i32, %arg1: i32) -> (i32, i32) {
    %c0_i32 = arith.constant 0 : i32
    %c0_i32_0 = arith.constant 0 : i32
    %c0_i32_1 = arith.constant 0 : i32
    return %c0_i32, %c0_i32_0 : i32, i32
  }
  func.func @transform_4(%arg0: i32, %arg1: i32) -> (i32, i32) {
    %c0_i32 = arith.constant 0 : i32
    %c0_i32_0 = arith.constant 0 : i32
    %c0_i32_1 = arith.constant 0 : i32
    return %c0_i32, %c0_i32_0 : i32, i32
  }
  func.func @transform_5(%arg0: i32, %arg1: i32) -> (i32, i32, i32, i32) {
    %c0_i32 = arith.constant 0 : i32
    %c0_i32_0 = arith.constant 0 : i32
    %c0_i32_1 = arith.constant 0 : i32
    return %arg0, %arg1, %c0_i32, %c0_i32_0 : i32, i32, i32, i32
  }
}

</mosaic_0001>

<llo_original>
// kernel: tpu_custom_call.1
$region0: #{tpu_custom_call.1}
  #allocation0 [shape = 'u32[]', space=smem, size = 0x4, offset = 0x4, fixed_abs, tag = 'smem constant byte address 0x4 - core index']
  #allocation1 [shape = 'u32[72,128]{1,0:T(1,128)}', space=vmem, size = 0x9000, scoped, tag = 'internal scratch']
  %s0 = inlined_call_operand.hbm [shape: bf16[2,16,16,72], index: 0, kind: input, shape index: {}]
  %s1 = inlined_call_operand.vmem [shape: bf16[72,8], index: 1, kind: input, shape index: {}]
  %s2 = inlined_call_operand.vmem [shape: f32[1,8], index: 2, kind: input, shape index: {}]
  %s3 = inlined_call_operand.vmem [shape: bf16[8,128], index: 3, kind: input, shape index: {}]
  %s4 = inlined_call_operand.vmem [shape: f32[1,128], index: 4, kind: input, shape index: {}]
  %s5 = inlined_call_operand.hbm [shape: bf16[2,16,16,128], index: 5, kind: output, shape index: {}]
  %s6 = sld [smem:[#allocation0]]
  $region57: #{tpu_custom_call.1} parent=0
    _
  %s8 = ssub.s32 1, %s6
  %s9 = scalar_select 0, %s8, %s6
  $region1: #{tpu_custom_call.1} parent=0
    #allocation2 [shape = 'u8[131072]{0}', space=vmem, size = 0x20000, scoped, tag = 'input window, operand 0']
    #allocation3 [shape = 's32[2]{0}', space=sflag, size = 0x8, scoped, tag = 'scoped memory for tpu_custom_call.1']
    #allocation4 [shape = 's32[2]{0}', space=sflag, size = 0x8, scoped, tag = 'scoped memory for tpu_custom_call.1']
    #allocation5 [shape = 'u8[131072]{0}', space=vmem, size = 0x20000, scoped, tag = 'output window, operand 0']
    %10 = vsyncpa [#allocation3], 0
    %s11 = scalar_lea.sflag [#allocation3], 1
    %12 = vsyncpa %s11, 0
    %13 = vsyncpa [#allocation4], 0
    %s14 = scalar_lea.sflag [#allocation4], 1
    %15 = vsyncpa %s14, 0
    loop: start=0, step=1, limit=4
    $region2: #{tpu_custom_call.1} parent=1 // loop_pre_header
      _
    $region3: #{tpu_custom_call.1} parent=1 // loop_header
      %s17 = sphi 0, %s21
      %p18 = scmp.ge.s32.totalorder %s17, 4
      %s24 = sphi 0, %s36
      %s25 = sphi 0, %s32
      %s26 = sphi 0, %s24
      %s27 = sphi 0, %s25
      %s28 = sphi 0, %s26
      %s29 = sphi 0, %s27
      %s41 = sphi 0, %s43
      %s44 = sphi 0, %s41
      %s45 = sphi 0, %s44
      %s61 = sphi 0, %s45
      %s65 = sphi 0, %s65
      %s67 = sphi 0, %s65
      %s68 = sphi 0, %s67
      %s82 = sphi 0, %s68
      %s86 = sphi 0, %s86
      %s88 = sphi 0, %s86
      %s89 = sphi 0, %s88
      %s103 = sphi 0, %s89
      %s107 = sphi 0, %s107
      %s109 = sphi 0, %s107
      %s110 = sphi 0, %s109
      %s124 = sphi 0, %s110
      %s128 = sphi 0, %s128
      %s130 = sphi 0, %s128
      %s131 = sphi 0, %s130
      %s145 = sphi 0, %s131
      %s153 = sphi 0, %s155
      %s156 = sphi 0, %s153
      %s157 = sphi 0, %s156
      %s173 = sphi 0, %s157
    $region4: #{tpu_custom_call.1} parent=1 // loop_header_branch
      %20 = sbr.rel (%p18) target = $region8
    $region5: #{tpu_custom_call.1} parent=1 // loop_body
      %s22 = ssub.s32 %s17, 1
      %s23 = ssub.s32 %s17, 2
      %s30 = sadd.s32 1, %s25
      %p31 = scmp.ge.s32.totalorder %s30, 1
      %s32 = scalar_select %p31, 0, %s30
      %s33 = sadd.s32 1, %s24
      %s34 = scalar_select %p31, %s33, %s24
      %p35 = scmp.ge.s32.totalorder %s34, 2
      %s36 = scalar_select %p35, 0, %s34
      %s37 = ssub.s32 %s24, %s36
      %s38 = ssub.s32 %s25, %s32
      %s39 = sor.u32 %s37, %s38
      %p40 = scmp.eq.s32.totalorder %s39, 0
      %s42 = sadd.s32 %s41, 1
      %s43 = scalar_select %p40, %s41, %s42
      %p46 = pneg %p40
      %p47 = scmp.eq.s32.totalorder %s17, 1
      %p48 = por %p46, %p47
      %p49 = scmp.ne.s32.totalorder %s41, %s44
      %p50 = scmp.eq.s32.totalorder %s17, 0
      %p51 = por %p49, %p50
      %p52 = scmp.ne.s32.totalorder %s41, %s44
      %p53 = scmp.eq.s32.totalorder %s22, 1
      %p54 = por %p52, %p53
      %p55 = scmp.ne.s32.totalorder %s44, %s45
      %p56 = scmp.eq.s32.totalorder %s22, 0
      %p57 = por %p55, %p56
      %p58 = scmp.ne.s32.totalorder %s44, %s45
      %p59 = scmp.eq.s32.totalorder %s23, 1
      %p60 = por %p58, %p59
      %p62 = scmp.ne.s32.totalorder %s45, %s61
      %p63 = scmp.eq.s32.totalorder %s23, 0
      %p64 = por %p62, %p63
      %s66 = sadd.s32 %s65, 1
      %p69 = scmp.eq.s32.totalorder %s17, 1
      %p70 = scmp.ne.s32.totalorder %s65, %s67
      %p71 = scmp.eq.s32.totalorder %s17, 0
      %p72 = por %p70, %p71
      %p73 = scmp.ne.s32.totalorder %s65, %s67
      %p74 = scmp.eq.s32.totalorder %s22, 1
      %p75 = por %p73, %p74
      %p76 = scmp.ne.s32.totalorder %s67, %s68
      %p77 = scmp.eq.s32.totalorder %s22, 0
      %p78 = por %p76, %p77
      %p79 = scmp.ne.s32.totalorder %s67, %s68
      %p80 = scmp.eq.s32.totalorder %s23, 1
      %p81 = por %p79, %p80
      %p83 = scmp.ne.s32.totalorder %s68, %s82
      %p84 = scmp.eq.s32.totalorder %s23, 0
      %p85 = por %p83, %p84
      %s87 = sadd.s32 %s86, 1
      %p90 = scmp.eq.s32.totalorder %s17, 1
      %p91 = scmp.ne.s32.totalorder %s86, %s88
      %p92 = scmp.eq.s32.totalorder %s17, 0
      %p93 = por %p91, %p92
      %p94 = scmp.ne.s32.totalorder %s86, %s88
      %p95 = scmp.eq.s32.totalorder %s22, 1
      %p96 = por %p94, %p95
      %p97 = scmp.ne.s32.totalorder %s88, %s89
      %p98 = scmp.eq.s32.totalorder %s22, 0
      %p99 = por %p97, %p98
      %p100 = scmp.ne.s32.totalorder %s88, %s89
      %p101 = scmp.eq.s32.totalorder %s23, 1
      %p102 = por %p100, %p101
      %p104 = scmp.ne.s32.totalorder %s89, %s103
      %p105 = scmp.eq.s32.totalorder %s23, 0
      %p106 = por %p104, %p105
      %s108 = sadd.s32 %s107, 1
      %p111 = scmp.eq.s32.totalorder %s17, 1
      %p112 = scmp.ne.s32.totalorder %s107, %s109
      %p113 = scmp.eq.s32.totalorder %s17, 0
      %p114 = por %p112, %p113
      %p115 = scmp.ne.s32.totalorder %s107, %s109
      %p116 = scmp.eq.s32.totalorder %s22, 1
      %p117 = por %p115, %p116
      %p118 = scmp.ne.s32.totalorder %s109, %s110
      %p119 = scmp.eq.s32.totalorder %s22, 0
      %p120 = por %p118, %p119
      %p121 = scmp.ne.s32.totalorder %s109, %s110
      %p122 = scmp.eq.s32.totalorder %s23, 1
      %p123 = por %p121, %p122
      %p125 = scmp.ne.s32.totalorder %s110, %s124
      %p126 = scmp.eq.s32.totalorder %s23, 0
      %p127 = por %p125, %p126
      %s129 = sadd.s32 %s128, 1
      %p132 = scmp.eq.s32.totalorder %s17, 1
      %p133 = scmp.ne.s32.totalorder %s128, %s130
      %p134 = scmp.eq.s32.totalorder %s17, 0
      %p135 = por %p133, %p134
      %p136 = scmp.ne.s32.totalorder %s128, %s130
      %p137 = scmp.eq.s32.totalorder %s22, 1
      %p138 = por %p136, %p137
      %p139 = scmp.ne.s32.totalorder %s130, %s131
      %p140 = scmp.eq.s32.totalorder %s22, 0
      %p141 = por %p139, %p140
      %p142 = scmp.ne.s32.totalorder %s130, %s131
      %p143 = scmp.eq.s32.totalorder %s23, 1
      %p144 = por %p142, %p143
      %p146 = scmp.ne.s32.totalorder %s131, %s145
      %p147 = scmp.eq.s32.totalorder %s23, 0
      %p148 = por %p146, %p147
      %s149 = ssub.s32 %s24, %s36
      %s150 = ssub.s32 %s25, %s32
      %s151 = sor.u32 %s149, %s150
      %p152 = scmp.eq.s32.totalorder %s151, 0
      %s154 = sadd.s32 %s153, 1
      %s155 = scalar_select %p152, %s153, %s154
      %p158 = pneg %p152
      %p159 = scmp.eq.s32.totalorder %s17, 1
      %p160 = por %p158, %p159
      %p161 = scmp.ne.s32.totalorder %s153, %s156
      %p162 = scmp.eq.s32.totalorder %s17, 0
      %p163 = por %p161, %p162
      %p164 = scmp.ne.s32.totalorder %s153, %s156
      %p165 = scmp.eq.s32.totalorder %s22, 1
      %p166 = por %p164, %p165
      %p167 = scmp.ne.s32.totalorder %s156, %s157
      %p168 = scmp.eq.s32.totalorder %s22, 0
      %p169 = por %p167, %p168
      %p170 = scmp.ne.s32.totalorder %s156, %s157
      %p171 = scmp.eq.s32.totalorder %s23, 1
      %p172 = por %p170, %p171
      %p174 = scmp.ne.s32.totalorder %s157, %s173
      %p175 = scmp.eq.s32.totalorder %s23, 0
      %p176 = por %p174, %p175
      %p177 = scmp.le.s32.totalorder 1, %s17
      %p178 = scmp.lt.s32.totalorder %s17, 3
      %p179 = pnand %p177, %p178
      %p180 = pneg %p179
      // Predicated region
      $region9: #{tpu_custom_call.1} parent=5 // pred_check
        _
      $region10: #{tpu_custom_call.1} parent=5 // pred_check_branch
        %182 = sbr.rel (%p179) target = $region12
      $region11: #{tpu_custom_call.1} parent=5 // pred_region
        %s183 = ssub.s32 %s17, 1
        // Predicated region
        $region13: #{tpu_custom_call.1} parent=11 // pred_check
          %p184 = pneg %p78
        $region14: #{tpu_custom_call.1} parent=11 // pred_check_branch
          %186 = sbr.rel (%p184) target = $region16
        $region15: #{tpu_custom_call.1} parent=11 // pred_region
          _
        $region16: #{tpu_custom_call.1} parent=11 // pred_fallthru
          _
        // Predicated region
        $region17: #{tpu_custom_call.1} parent=11 // pred_check
          %p187 = pneg %p99
        $region18: #{tpu_custom_call.1} parent=11 // pred_check_branch
          %189 = sbr.rel (%p187) target = $region20
        $region19: #{tpu_custom_call.1} parent=11 // pred_region
          _
        $region20: #{tpu_custom_call.1} parent=11 // pred_fallthru
          _
        // Predicated region
        $region21: #{tpu_custom_call.1} parent=11 // pred_check
          %p190 = pneg %p120
        $region22: #{tpu_custom_call.1} parent=11 // pred_check_branch
          %192 = sbr.rel (%p190) target = $region24
        $region23: #{tpu_custom_call.1} parent=11 // pred_region
          _
        $region24: #{tpu_custom_call.1} parent=11 // pred_fallthru
          _
        // Predicated region
        $region25: #{tpu_custom_call.1} parent=11 // pred_check
          %p193 = pneg %p141
        $region26: #{tpu_custom_call.1} parent=11 // pred_check_branch
          %195 = sbr.rel (%p193) target = $region28
        $region27: #{tpu_custom_call.1} parent=11 // pred_region
          _
        $region28: #{tpu_custom_call.1} parent=11 // pred_fallthru
          _
      $region12: #{tpu_custom_call.1} parent=5 // pred_fallthru
        _
      %p196 = scmp.lt.s32.totalorder %s17, 2
      // Predicated region
      $region29: #{tpu_custom_call.1} parent=5 // pred_check
        %p197 = pneg %p196
      $region30: #{tpu_custom_call.1} parent=5 // pred_check_branch
        %199 = sbr.rel (%p197) target = $region32
      $region31: #{tpu_custom_call.1} parent=5 // pred_region
        // Predicated region
        $region33: #{tpu_custom_call.1} parent=31 // pred_check
          %p200 = pneg %p51
        $region34: #{tpu_custom_call.1} parent=31 // pred_check_branch
          %202 = sbr.rel (%p200) target = $region36
        $region35: #{tpu_custom_call.1} parent=31 // pred_region
          %s203 = sand.u32 %s41, 1
          %s204 = scalar_lea.sflag [#allocation3], %s203
          %s205 = sand.u32 %s41, 1
          %s206 = smul.addr %s205, 128
          %s207 = scalar_lea.vmem [#allocation2], %s206
          %s208 = smul.u32 16, %s25
          %210 = vsyncadd %s204, 0
          %s211 = smul.addr %s208, 2
          %s212 = smul.addr %s24, 32
          %s213 = sadd.s32 %s211, %s212
          %s214 = smul.addr %s213, 4
          %s215 = scalar_lea.hbm %s0, %s214
          %s216 = sshll.u32 %s215, 4
          %s217 = int_to_ptr.hbm [resolvable:$true] %s216
          %s218 = sshll.u32 %s207, 4
          %s219 = int_to_ptr.vmem [resolvable:$true] %s218
          %224 = dma.hbm_to_vmem [thread:$0]  %s217, 2048, %s219, %s204, 64, 64, 4
        $region36: #{tpu_custom_call.1} parent=31 // pred_fallthru
          _
      $region32: #{tpu_custom_call.1} parent=5 // pred_fallthru
        _
      %p225 = scmp.le.s32.totalorder 1, %s17
      %p226 = scmp.lt.s32.totalorder %s17, 3
      %p227 = pnand %p225, %p226
      %p228 = pneg %p227
      // Predicated region
      $region37: #{tpu_custom_call.1} parent=5 // pred_check
        _
      $region38: #{tpu_custom_call.1} parent=5 // pred_check_branch
        %230 = sbr.rel (%p227) target = $region40
      $region39: #{tpu_custom_call.1} parent=5 // pred_region
        %s231 = ssub.s32 %s17, 1
        %s232 = sand.u32 %s44, 1
        %s233 = scalar_lea.sflag [#allocation3], %s232
        %s234 = sand.u32 %s44, 1
        %s235 = smul.addr %s234, 128
        %s236 = scalar_lea.vmem [#allocation2], %s235
        // Predicated region
        $region41: #{tpu_custom_call.1} parent=39 // pred_check
          %p237 = pneg %p57
        $region42: #{tpu_custom_call.1} parent=39 // pred_check_branch
          %239 = sbr.rel (%p237) target = $region44
        $region43: #{tpu_custom_call.1} parent=39 // pred_region
          %241 = dma.done %s233, 2048
        $region44: #{tpu_custom_call.1} parent=39 // pred_fallthru
          _
        %s242 = sand.u32 %s44, 1
        %s243 = scalar_lea.sflag [#allocation3], %s242
        %s244 = sand.u32 %s44, 1
        %s245 = smul.addr %s244, 128
        %s246 = scalar_lea.vmem [#allocation2], %s245
        %p247 = pneg %p57
        %p248 = pneg %p54
        %p249 = pneg %p78
        %p250 = pneg %p75
        %p251 = pneg %p99
        %p252 = pneg %p96
        %p253 = pneg %p120
        %p254 = pneg %p117
        %p255 = pneg %p141
        %p256 = pneg %p138
        %p257 = pneg %p169
        %p258 = pneg %p166
        %s259 = sand.u32 %s156, 1
        %s260 = scalar_lea.sflag [#allocation4], %s259
        %s261 = sand.u32 %s156, 1
        %s262 = smul.addr %s261, 128
        %s263 = scalar_lea.vmem [#allocation5], %s262
        %s264 = smul.u32 16, %s27
        %s265 = smul.u32 16, %s27
        %v267 = vld [vmem:[%s236] sm:$0xf]
        %v268 = vld [vmem:[%s236 + $0x4] sm:$0xf]
        %v269 = vld [vmem:[%s236 + $0x8] sm:$0xf]
        %v270 = vld [vmem:[%s236 + $0xc] sm:$0xf]
        %v271 = vld [vmem:[%s236 + $0x10] sm:$0xf]
        %v272 = vld [vmem:[%s236 + $0x14] sm:$0xf]
        %v273 = vld [vmem:[%s236 + $0x18] sm:$0xf]
        %v274 = vld [vmem:[%s236 + $0x1c] sm:$0xf]
        %v275 = vld [vmem:[%s236 + $0x20] sm:$0xf]
        %v276 = vld [vmem:[%s236 + $0x24] sm:$0xf]
        %v277 = vld [vmem:[%s236 + $0x28] sm:$0xf]
        %v278 = vld [vmem:[%s236 + $0x2c] sm:$0xf]
        %v279 = vld [vmem:[%s236 + $0x30] sm:$0xf]
        %v280 = vld [vmem:[%s236 + $0x34] sm:$0xf]
        %v281 = vld [vmem:[%s236 + $0x38] sm:$0xf]
        %v282 = vld [vmem:[%s236 + $0x3c] sm:$0xf]
        %v283 = vld [vmem:[%s236 + $0x40] sm:$0xf]
        %v284 = vld [vmem:[%s236 + $0x44] sm:$0xf]
        %v285 = vld [vmem:[%s236 + $0x48] sm:$0xf]
        %v286 = vld [vmem:[%s236 + $0x4c] sm:$0xf]
        %v287 = vld [vmem:[%s236 + $0x50] sm:$0xf]
        %v288 = vld [vmem:[%s236 + $0x54] sm:$0xf]
        %v289 = vld [vmem:[%s236 + $0x58] sm:$0xf]
        %v290 = vld [vmem:[%s236 + $0x5c] sm:$0xf]
        %v291 = vld [vmem:[%s236 + $0x60] sm:$0xf]
        %v292 = vld [vmem:[%s236 + $0x64] sm:$0xf]
        %v293 = vld [vmem:[%s236 + $0x68] sm:$0xf]
        %v294 = vld [vmem:[%s236 + $0x6c] sm:$0xf]
        %v295 = vld [vmem:[%s236 + $0x70] sm:$0xf]
        %v296 = vld [vmem:[%s236 + $0x74] sm:$0xf]
        %v297 = vld [vmem:[%s236 + $0x78] sm:$0xf]
        %v298 = vld [vmem:[%s236 + $0x7c] sm:$0xf]
        %v299 = vld [vmem:[%s1] sm:$0xf]
        %v300 = vld [vmem:[%s1 + $0x4] sm:$0xf]
        %v301 = vld [vmem:[%s1 + $0x8] sm:$0xf]
        %v302 = vld [vmem:[%s1 + $0xc] sm:$0xf]
        %v303 = vld [vmem:[%s1 + $0x10] sm:$0xf]
        %v304 = vld [vmem:[%s1 + $0x14] sm:$0xf]
        %v305 = vld [vmem:[%s1 + $0x18] sm:$0xf]
        %v306 = vld [vmem:[%s1 + $0x1c] sm:$0xf]
        %v307 = vld [vmem:[%s1 + $0x20] sm:$0xf]
        %v308 = vld [vmem:[%s2] sm:$0x1]
        %v310 = vperm.slane %v308, 0
        %v344 = vunpack.c.l.b16 %v267
        %v345 = vunpack.c.l.b16 %v268
        %v346 = vunpack.c.l.b16 %v269
        %v347 = vunpack.c.l.b16 %v270
        %v348 = vunpack.c.l.b16 %v271
        %v349 = vunpack.c.l.b16 %v272
        %v350 = vunpack.c.l.b16 %v273
        %v351 = vunpack.c.l.b16 %v274
        %v352 = vunpack.c.l.b16 %v275
        %v353 = vunpack.c.l.b16 %v276
        %v354 = vunpack.c.l.b16 %v277
        %v355 = vunpack.c.l.b16 %v278
        %v356 = vunpack.c.l.b16 %v279
        %v357 = vunpack.c.l.b16 %v280
        %v358 = vunpack.c.l.b16 %v281
        %v359 = vunpack.c.l.b16 %v282
        %v360 = vunpack.c.l.b16 %v283
        %v361 = vunpack.c.l.b16 %v284
        %v362 = vunpack.c.l.b16 %v285
        %v363 = vunpack.c.l.b16 %v286
        %v364 = vunpack.c.l.b16 %v287
        %v365 = vunpack.c.l.b16 %v288
        %v366 = vunpack.c.l.b16 %v289
        %v367 = vunpack.c.l.b16 %v290
        %v368 = vunpack.c.l.b16 %v291
        %v369 = vunpack.c.l.b16 %v292
        %v370 = vunpack.c.l.b16 %v293
        %v371 = vunpack.c.l.b16 %v294
        %v372 = vunpack.c.l.b16 %v295
        %v373 = vunpack.c.l.b16 %v296
        %v374 = vunpack.c.l.b16 %v297
        %v375 = vunpack.c.l.b16 %v298
        %v376 = vpack.c.b16 %v345, %v344
        %v377 = vpack.c.b16 %v347, %v346
        %v378 = vpack.c.b16 %v349, %v348
        %v379 = vpack.c.b16 %v351, %v350
        %v380 = vpack.c.b16 %v353, %v352
        %v381 = vpack.c.b16 %v355, %v354
        %v382 = vpack.c.b16 %v357, %v356
        %v383 = vpack.c.b16 %v359, %v358
        %v384 = vpack.c.b16 %v361, %v360
        %v385 = vpack.c.b16 %v363, %v362
        %v386 = vpack.c.b16 %v365, %v364
        %v387 = vpack.c.b16 %v367, %v366
        %v388 = vpack.c.b16 %v369, %v368
        %v389 = vpack.c.b16 %v371, %v370
        %v390 = vpack.c.b16 %v373, %v372
        %v391 = vpack.c.b16 %v375, %v374
        %v401 = vunpack.c.l.b16 %v299
        %v402 = vunpack.c.l.b16 %v300
        %v403 = vunpack.c.l.b16 %v301
        %v404 = vunpack.c.l.b16 %v302
        %v405 = vunpack.c.l.b16 %v303
        %v406 = vunpack.c.l.b16 %v304
        %v407 = vunpack.c.l.b16 %v305
        %v408 = vunpack.c.l.b16 %v306
        %v409 = vunpack.c.l.b16 %v307
        %v410 = vpack.c.b16 %v402, %v401
        %v411 = vpack.c.b16 %v404, %v403
        %v412 = vpack.c.b16 %v406, %v405
        %v413 = vpack.c.b16 %v408, %v407
        %v414 = vpack.c.b16 %v409, %v409
        %vm419 = vcmask 588800
        %v421 = vsel %vm419, %v376, 0
        %v424 = vsel %vm419, %v377, 0
        %v427 = vsel %vm419, %v378, 0
        %v430 = vsel %vm419, %v379, 0
        %v433 = vsel %vm419, %v380, 0
        %v436 = vsel %vm419, %v381, 0
        %v439 = vsel %vm419, %v382, 0
        %v442 = vsel %vm419, %v383, 0
        %v445 = vsel %vm419, %v384, 0
        %v448 = vsel %vm419, %v385, 0
        %v451 = vsel %vm419, %v386, 0
        %v454 = vsel %vm419, %v387, 0
        %v457 = vsel %vm419, %v388, 0
        %v460 = vsel %vm419, %v389, 0
        %v463 = vsel %vm419, %v390, 0
        %v466 = vsel %vm419, %v391, 0
        %vm468 = vcmask 1043456
        %v470 = vsel %vm468, %v414, 0
        %472 = vmatpush.bf16.msra.mxu0 0
        %473 = vmatpush.bf16.msra.mxu0 0
        %474 = vmatpush.bf16.msra.mxu0 0
        %475 = vmatpush.bf16.msra.mxu0 %v470
        %476 = vmatpush.bf16.msra.mxu0 %v413
        %477 = vmatpush.bf16.msra.mxu0 %v412
        %478 = vmatpush.bf16.msra.mxu0 %v411
        %479 = vmatpush.bf16.msra.mxu0 %v410
        %480 = vmatmul.bf16.gmra.mxu0 %v421
        %v481 = vpop.f32.mrf.mxu0
        %v482 = vadd.f32 %v310, %v481
        %v483 = vpop.f32.mrf.mxu0
        %v484 = vadd.f32 %v310, %v483
        %485 = vmatmul.bf16.gmra.mxu0 %v424
        %v486 = vpop.f32.mrf.mxu0
        %v487 = vadd.f32 %v310, %v486
        %v488 = vpop.f32.mrf.mxu0
        %v489 = vadd.f32 %v310, %v488
        %490 = vmatmul.bf16.gmra.mxu0 %v427
        %v491 = vpop.f32.mrf.mxu0
        %v492 = vadd.f32 %v310, %v491
        %v493 = vpop.f32.mrf.mxu0
        %v494 = vadd.f32 %v310, %v493
        %495 = vmatmul.bf16.gmra.mxu0 %v430
        %v496 = vpop.f32.mrf.mxu0
        %v497 = vadd.f32 %v310, %v496
        %v498 = vpop.f32.mrf.mxu0
        %v499 = vadd.f32 %v310, %v498
        %500 = vmatmul.bf16.gmra.mxu0 %v433
        %v501 = vpop.f32.mrf.mxu0
        %v502 = vadd.f32 %v310, %v501
        %v503 = vpop.f32.mrf.mxu0
        %v504 = vadd.f32 %v310, %v503
        %505 = vmatmul.bf16.gmra.mxu0 %v436
        %v506 = vpop.f32.mrf.mxu0
        %v507 = vadd.f32 %v310, %v506
        %v508 = vpop.f32.mrf.mxu0
        %v509 = vadd.f32 %v310, %v508
        %510 = vmatmul.bf16.gmra.mxu0 %v439
        %v511 = vpop.f32.mrf.mxu0
        %v512 = vadd.f32 %v310, %v511
        %v513 = vpop.f32.mrf.mxu0
        %v514 = vadd.f32 %v310, %v513
        %515 = vmatmul.bf16.gmra.mxu0 %v442
        %v516 = vpop.f32.mrf.mxu0
        %v517 = vadd.f32 %v310, %v516
        %v518 = vpop.f32.mrf.mxu0
        %v519 = vadd.f32 %v310, %v518
        %520 = vmatmul.bf16.gmra.mxu0 %v445
        %v521 = vpop.f32.mrf.mxu0
        %v522 = vadd.f32 %v310, %v521
        %v523 = vpop.f32.mrf.mxu0
        %v524 = vadd.f32 %v310, %v523
        %525 = vmatmul.bf16.gmra.mxu0 %v448
        %v526 = vpop.f32.mrf.mxu0
        %v527 = vadd.f32 %v310, %v526
        %v528 = vpop.f32.mrf.mxu0
        %v529 = vadd.f32 %v310, %v528
        %530 = vmatmul.bf16.gmra.mxu0 %v451
        %v531 = vpop.f32.mrf.mxu0
        %v532 = vadd.f32 %v310, %v531
        %v533 = vpop.f32.mrf.mxu0
        %v534 = vadd.f32 %v310, %v533
        %535 = vmatmul.bf16.gmra.mxu0 %v454
        %v536 = vpop.f32.mrf.mxu0
        %v537 = vadd.f32 %v310, %v536
        %v538 = vpop.f32.mrf.mxu0
        %v539 = vadd.f32 %v310, %v538
        %540 = vmatmul.bf16.gmra.mxu0 %v457
        %v541 = vpop.f32.mrf.mxu0
        %v542 = vadd.f32 %v310, %v541
        %v543 = vpop.f32.mrf.mxu0
        %v544 = vadd.f32 %v310, %v543
        %545 = vmatmul.bf16.gmra.mxu0 %v460
        %v546 = vpop.f32.mrf.mxu0
        %v547 = vadd.f32 %v310, %v546
        %v548 = vpop.f32.mrf.mxu0
        %v549 = vadd.f32 %v310, %v548
        %550 = vmatmul.bf16.gmra.mxu0 %v463
        %v551 = vpop.f32.mrf.mxu0
        %v552 = vadd.f32 %v310, %v551
        %v553 = vpop.f32.mrf.mxu0
        %v554 = vadd.f32 %v310, %v553
        %555 = vmatmul.bf16.gmra.mxu0 %v466
        %v556 = vpop.f32.mrf.mxu0
        %v557 = vadd.f32 %v310, %v556
        %v558 = vpop.f32.mrf.mxu0
        %v559 = vadd.f32 %v310, %v558
        %560 = vdwg.mxu0
        %v561 = vmax.f32 %v482, 0.0
        %v562 = vmax.f32 %v484, 0.0
        %v563 = vmax.f32 %v487, 0.0
        %v564 = vmax.f32 %v489, 0.0
        %v565 = vmax.f32 %v492, 0.0
        %v566 = vmax.f32 %v494, 0.0
        %v567 = vmax.f32 %v497, 0.0
        %v568 = vmax.f32 %v499, 0.0
        %v569 = vmax.f32 %v502, 0.0
        %v570 = vmax.f32 %v504, 0.0
        %v571 = vmax.f32 %v507, 0.0
        %v572 = vmax.f32 %v509, 0.0
        %v573 = vmax.f32 %v512, 0.0
        %v574 = vmax.f32 %v514, 0.0
        %v575 = vmax.f32 %v517, 0.0
        %v576 = vmax.f32 %v519, 0.0
        %v577 = vmax.f32 %v522, 0.0
        %v578 = vmax.f32 %v524, 0.0
        %v579 = vmax.f32 %v527, 0.0
        %v580 = vmax.f32 %v529, 0.0
        %v581 = vmax.f32 %v532, 0.0
        %v582 = vmax.f32 %v534, 0.0
        %v583 = vmax.f32 %v537, 0.0
        %v584 = vmax.f32 %v539, 0.0
        %v585 = vmax.f32 %v542, 0.0
        %v586 = vmax.f32 %v544, 0.0
        %v587 = vmax.f32 %v547, 0.0
        %v588 = vmax.f32 %v549, 0.0
        %v589 = vmax.f32 %v552, 0.0
        %v590 = vmax.f32 %v554, 0.0
        %v591 = vmax.f32 %v557, 0.0
        %v592 = vmax.f32 %v559, 0.0
        %v593 = vpack.c.bf16 %v562, %v561
        %v594 = vpack.c.bf16 %v564, %v563
        %v595 = vpack.c.bf16 %v566, %v565
        %v596 = vpack.c.bf16 %v568, %v567
        %v597 = vpack.c.bf16 %v570, %v569
        %v598 = vpack.c.bf16 %v572, %v571
        %v599 = vpack.c.bf16 %v574, %v573
        %v600 = vpack.c.bf16 %v576, %v575
        %v601 = vpack.c.bf16 %v578, %v577
        %v602 = vpack.c.bf16 %v580, %v579
        %v603 = vpack.c.bf16 %v582, %v581
        %v604 = vpack.c.bf16 %v584, %v583
        %v605 = vpack.c.bf16 %v586, %v585
        %v606 = vpack.c.bf16 %v588, %v587
        %v607 = vpack.c.bf16 %v590, %v589
        %v608 = vpack.c.bf16 %v592, %v591
        %v609 = vld [vmem:[%s3] sm:$0xf]
        %v610 = vld [vmem:[%s4] sm:$0x1]
        %v612 = vperm.slane %v610, 0
        %vm614 = vcmask 64512
        %v616 = vsel %vm614, %v593, 0
        %v619 = vsel %vm614, %v594, 0
        %v622 = vsel %vm614, %v595, 0
        %v625 = vsel %vm614, %v596, 0
        %v628 = vsel %vm614, %v597, 0
        %v631 = vsel %vm614, %v598, 0
        %v634 = vsel %vm614, %v599, 0
        %v637 = vsel %vm614, %v600, 0
        %v640 = vsel %vm614, %v601, 0
        %v643 = vsel %vm614, %v602, 0
        %v646 = vsel %vm614, %v603, 0
        %v649 = vsel %vm614, %v604, 0
        %v652 = vsel %vm614, %v605, 0
        %v655 = vsel %vm614, %v606, 0
        %v658 = vsel %vm614, %v607, 0
        %v661 = vsel %vm614, %v608, 0
        %v664 = vsel %vm468, %v609, 0
        %666 = vmatpush.bf16.msra.mxu0 0
        %667 = vmatpush.bf16.msra.mxu0 0
        %668 = vmatpush.bf16.msra.mxu0 0
        %669 = vmatpush.bf16.msra.mxu0 0
        %670 = vmatpush.bf16.msra.mxu0 0
        %671 = vmatpush.bf16.msra.mxu0 0
        %672 = vmatpush.bf16.msra.mxu0 0
        %673 = vmatpush.bf16.msra.mxu0 %v664
        %674 = vmatmul.bf16.gmra.mxu0 %v616
        %v675 = vpop.f32.mrf.mxu0
        %v676 = vadd.f32 %v612, %v675
        %v677 = vpop.f32.mrf.mxu0
        %v678 = vadd.f32 %v612, %v677
        %679 = vmatmul.bf16.gmra.mxu0 %v619
        %v680 = vpop.f32.mrf.mxu0
        %v681 = vadd.f32 %v612, %v680
        %v682 = vpop.f32.mrf.mxu0
        %v683 = vadd.f32 %v612, %v682
        %684 = vmatmul.bf16.gmra.mxu0 %v622
        %v685 = vpop.f32.mrf.mxu0
        %v686 = vadd.f32 %v612, %v685
        %v687 = vpop.f32.mrf.mxu0
        %v688 = vadd.f32 %v612, %v687
        %689 = vmatmul.bf16.gmra.mxu0 %v625
        %v690 = vpop.f32.mrf.mxu0
        %v691 = vadd.f32 %v612, %v690
        %v692 = vpop.f32.mrf.mxu0
        %v693 = vadd.f32 %v612, %v692
        %694 = vmatmul.bf16.gmra.mxu0 %v628
        %v695 = vpop.f32.mrf.mxu0
        %v696 = vadd.f32 %v612, %v695
        %v697 = vpop.f32.mrf.mxu0
        %v698 = vadd.f32 %v612, %v697
        %699 = vmatmul.bf16.gmra.mxu0 %v631
        %v700 = vpop.f32.mrf.mxu0
        %v701 = vadd.f32 %v612, %v700
        %v702 = vpop.f32.mrf.mxu0
        %v703 = vadd.f32 %v612, %v702
        %704 = vmatmul.bf16.gmra.mxu0 %v634
        %v705 = vpop.f32.mrf.mxu0
        %v706 = vadd.f32 %v612, %v705
        %v707 = vpop.f32.mrf.mxu0
        %v708 = vadd.f32 %v612, %v707
        %709 = vmatmul.bf16.gmra.mxu0 %v637
        %v710 = vpop.f32.mrf.mxu0
        %v711 = vadd.f32 %v612, %v710
        %v712 = vpop.f32.mrf.mxu0
        %v713 = vadd.f32 %v612, %v712
        %714 = vmatmul.bf16.gmra.mxu0 %v640
        %v715 = vpop.f32.mrf.mxu0
        %v716 = vadd.f32 %v612, %v715
        %v717 = vpop.f32.mrf.mxu0
        %v718 = vadd.f32 %v612, %v717
        %719 = vmatmul.bf16.gmra.mxu0 %v643
        %v720 = vpop.f32.mrf.mxu0
        %v721 = vadd.f32 %v612, %v720
        %v722 = vpop.f32.mrf.mxu0
        %v723 = vadd.f32 %v612, %v722
        %724 = vmatmul.bf16.gmra.mxu0 %v646
        %v725 = vpop.f32.mrf.mxu0
        %v726 = vadd.f32 %v612, %v725
        %v727 = vpop.f32.mrf.mxu0
        %v728 = vadd.f32 %v612, %v727
        %729 = vmatmul.bf16.gmra.mxu0 %v649
        %v730 = vpop.f32.mrf.mxu0
        %v731 = vadd.f32 %v612, %v730
        %v732 = vpop.f32.mrf.mxu0
        %v733 = vadd.f32 %v612, %v732
        %734 = vmatmul.bf16.gmra.mxu0 %v652
        %v735 = vpop.f32.mrf.mxu0
        %v736 = vadd.f32 %v612, %v735
        %v737 = vpop.f32.mrf.mxu0
        %v738 = vadd.f32 %v612, %v737
        %739 = vmatmul.bf16.gmra.mxu0 %v655
        %v740 = vpop.f32.mrf.mxu0
        %v741 = vadd.f32 %v612, %v740
        %v742 = vpop.f32.mrf.mxu0
        %v743 = vadd.f32 %v612, %v742
        %744 = vmatmul.bf16.gmra.mxu0 %v658
        %v745 = vpop.f32.mrf.mxu0
        %v746 = vadd.f32 %v612, %v745
        %v747 = vpop.f32.mrf.mxu0
        %v748 = vadd.f32 %v612, %v747
        %749 = vmatmul.bf16.gmra.mxu0 %v661
        %v750 = vpop.f32.mrf.mxu0
        %v751 = vadd.f32 %v612, %v750
        %v752 = vpop.f32.mrf.mxu0
        %v753 = vadd.f32 %v612, %v752
        %754 = vdwg.mxu0
        %v755 = vpack.c.bf16 %v676, %v676
        %v756 = vpack.c.bf16 %v678, %v678
        %v757 = vpack.c.bf16 %v681, %v681
        %v758 = vpack.c.bf16 %v683, %v683
        %v759 = vpack.c.bf16 %v686, %v686
        %v760 = vpack.c.bf16 %v688, %v688
        %v761 = vpack.c.bf16 %v691, %v691
        %v762 = vpack.c.bf16 %v693, %v693
        %v763 = vpack.c.bf16 %v696, %v696
        %v764 = vpack.c.bf16 %v698, %v698
        %v765 = vpack.c.bf16 %v701, %v701
        %v766 = vpack.c.bf16 %v703, %v703
        %v767 = vpack.c.bf16 %v706, %v706
        %v768 = vpack.c.bf16 %v708, %v708
        %v769 = vpack.c.bf16 %v711, %v711
        %v770 = vpack.c.bf16 %v713, %v713
        %v771 = vpack.c.bf16 %v716, %v716
        %v772 = vpack.c.bf16 %v718, %v718
        %v773 = vpack.c.bf16 %v721, %v721
        %v774 = vpack.c.bf16 %v723, %v723
        %v775 = vpack.c.bf16 %v726, %v726
        %v776 = vpack.c.bf16 %v728, %v728
        %v777 = vpack.c.bf16 %v731, %v731
        %v778 = vpack.c.bf16 %v733, %v733
        %v779 = vpack.c.bf16 %v736, %v736
        %v780 = vpack.c.bf16 %v738, %v738
        %v781 = vpack.c.bf16 %v741, %v741
        %v782 = vpack.c.bf16 %v743, %v743
        %v783 = vpack.c.bf16 %v746, %v746
        %v784 = vpack.c.bf16 %v748, %v748
        %v785 = vpack.c.bf16 %v751, %v751
        %v786 = vpack.c.bf16 %v753, %v753
        %787 = vst [vmem:[%s263] sm:$0xf] %v755
        %788 = vst [vmem:[%s263 + $0x4] sm:$0xf] %v756
        %789 = vst [vmem:[%s263 + $0x8] sm:$0xf] %v757
        %790 = vst [vmem:[%s263 + $0xc] sm:$0xf] %v758
        %791 = vst [vmem:[%s263 + $0x10] sm:$0xf] %v759
        %792 = vst [vmem:[%s263 + $0x14] sm:$0xf] %v760
        %793 = vst [vmem:[%s263 + $0x18] sm:$0xf] %v761
        %794 = vst [vmem:[%s263 + $0x1c] sm:$0xf] %v762
        %795 = vst [vmem:[%s263 + $0x20] sm:$0xf] %v763
        %796 = vst [vmem:[%s263 + $0x24] sm:$0xf] %v764
        %797 = vst [vmem:[%s263 + $0x28] sm:$0xf] %v765
        %798 = vst [vmem:[%s263 + $0x2c] sm:$0xf] %v766
        %799 = vst [vmem:[%s263 + $0x30] sm:$0xf] %v767
        %800 = vst [vmem:[%s263 + $0x34] sm:$0xf] %v768
        %801 = vst [vmem:[%s263 + $0x38] sm:$0xf] %v769
        %802 = vst [vmem:[%s263 + $0x3c] sm:$0xf] %v770
        %803 = vst [vmem:[%s263 + $0x40] sm:$0xf] %v771
        %804 = vst [vmem:[%s263 + $0x44] sm:$0xf] %v772
        %805 = vst [vmem:[%s263 + $0x48] sm:$0xf] %v773
        %806 = vst [vmem:[%s263 + $0x4c] sm:$0xf] %v774
        %807 = vst [vmem:[%s263 + $0x50] sm:$0xf] %v775
        %808 = vst [vmem:[%s263 + $0x54] sm:$0xf] %v776
        %809 = vst [vmem:[%s263 + $0x58] sm:$0xf] %v777
        %810 = vst [vmem:[%s263 + $0x5c] sm:$0xf] %v778
        %811 = vst [vmem:[%s263 + $0x60] sm:$0xf] %v779
        %812 = vst [vmem:[%s263 + $0x64] sm:$0xf] %v780
        %813 = vst [vmem:[%s263 + $0x68] sm:$0xf] %v781
        %814 = vst [vmem:[%s263 + $0x6c] sm:$0xf] %v782
        %815 = vst [vmem:[%s263 + $0x70] sm:$0xf] %v783
        %816 = vst [vmem:[%s263 + $0x74] sm:$0xf] %v784
        %817 = vst [vmem:[%s263 + $0x78] sm:$0xf] %v785
        %818 = vst [vmem:[%s263 + $0x7c] sm:$0xf] %v786
        %s819 = sand.u32 %s156, 1
        %s820 = scalar_lea.sflag [#allocation4], %s819
        %s821 = sand.u32 %s156, 1
        %s822 = smul.addr %s821, 128
        %s823 = scalar_lea.vmem [#allocation5], %s822
        // Predicated region
        $region45: #{tpu_custom_call.1} parent=39 // pred_check
          %p824 = pneg %p166
        $region46: #{tpu_custom_call.1} parent=39 // pred_check_branch
          %826 = sbr.rel (%p824) target = $region48
        $region47: #{tpu_custom_call.1} parent=39 // pred_region
          %s827 = smul.u32 16, %s27
          %829 = vsyncadd %s820, 0
          %s830 = smul.addr %s827, 2
          %s831 = smul.addr %s26, 32
          %s832 = sadd.s32 %s830, %s831
          %s833 = smul.addr %s832, 4
          %s834 = scalar_lea.hbm %s5, %s833
          %s835 = sshll.u32 %s823, 4
          %s836 = int_to_ptr.vmem [resolvable:$true] %s835
          %s837 = sshll.u32 %s834, 4
          %s838 = int_to_ptr.hbm [resolvable:$true] %s837
          %843 = dma.vmem_to_hbm [thread:$0]  %s836, 2048, %s838, %s820, 64, 64, 4
        $region48: #{tpu_custom_call.1} parent=39 // pred_fallthru
          _
      $region40: #{tpu_custom_call.1} parent=5 // pred_fallthru
        _
      %p844 = scmp.le.s32.totalorder 2, %s17
      // Predicated region
      $region49: #{tpu_custom_call.1} parent=5 // pred_check
        %p845 = pneg %p844
      $region50: #{tpu_custom_call.1} parent=5 // pred_check_branch
        %847 = sbr.rel (%p845) target = $region52
      $region51: #{tpu_custom_call.1} parent=5 // pred_region
        %s848 = ssub.s32 %s17, 2
        // Predicated region
        $region53: #{tpu_custom_call.1} parent=51 // pred_check
          %p849 = pneg %p172
        $region54: #{tpu_custom_call.1} parent=51 // pred_check_branch
          %851 = sbr.rel (%p849) target = $region56
        $region55: #{tpu_custom_call.1} parent=51 // pred_region
          %s852 = sand.u32 %s157, 1
          %s853 = scalar_lea.sflag [#allocation4], %s852
          %s854 = sand.u32 %s157, 1
          %s855 = smul.addr %s854, 128
          %s856 = scalar_lea.vmem [#allocation5], %s855
          %858 = dma.done %s853, 2048
        $region56: #{tpu_custom_call.1} parent=51 // pred_fallthru
          _
      $region52: #{tpu_custom_call.1} parent=5 // pred_fallthru
        _
    $region6: #{tpu_custom_call.1} parent=1 // loop_footer
      %s21 = sadd.s32 1, %s17
    $region7: #{tpu_custom_call.1} parent=1 // loop_footer_branch
      %16 = sbr.rel target = $region3
    $region8: #{tpu_custom_call.1} parent=1 // loop_exit
      _
    %859 = vsyncpa [#allocation3], 1
    %s860 = scalar_lea.sflag [#allocation3], 1
    %861 = vsyncpa %s860, 1
    %862 = vsyncpa [#allocation4], 1
    %s863 = scalar_lea.sflag [#allocation4], 1
    %864 = vsyncpa %s863, 1

</llo_original>
